<compile_context>
chip_gen: v6e
topology: v6e:2x2x1
jax: 0.10.0
libtpu: 0.0.40
codegen_flags: <defaults>
</compile_context>

<pallas_src>
import functools

import jax
import jax.numpy as jnp
from jax import lax
from jax.experimental import pallas as pl
from jax.experimental.pallas import tpu as pltpu


def _round_up(v, m):
    return ((v + m - 1) // m) * m


def _fc_kernel(x_ref, w_ref, b_ref, o_ref, acc_ref):
    # x_ref: (tm, tk)   activations tile
    # w_ref: (tn, tk)   weight tile in PyTorch (C_out, C_in) layout
    # b_ref: (1,  tn)   bias tile (N-tiled only)
    # o_ref: (tm, tn)   output tile
    # acc_ref: (tm, tn) f32 accumulator scratch, resident across the K axis
    k = pl.program_id(2)

    @pl.when(k == 0)
    def _():
        acc_ref[...] = jnp.zeros_like(acc_ref)

    # Contract x's C_in (dim 1) against weight's C_in (dim 1): (tm,tk)x(tn,tk)->(tm,tn)
    acc_ref[...] += lax.dot_general(
        x_ref[...], w_ref[...],
        dimension_numbers=(((1,), (1,)), ((), ())),
        preferred_element_type=jnp.float32,
    )

    @pl.when(k == pl.num_programs(2) - 1)
    def _():
        # Bias added once, on the final K step only.
        o_ref[...] = (acc_ref[...] + b_ref[...]).astype(o_ref.dtype)


@functools.partial(jax.jit, static_argnames=("tm", "tn", "tk"))
def fc_forward(x, weight, bias, *, tm=128, tn=256, tk=256):
    """y = x @ weight.T + bias (PyTorch nn.Linear forward) via Pallas on TPU.

    Args:
      x:      (..., C_in)   float32
      weight: (C_out, C_in) float32  (PyTorch layout — NOT transposed here)
      bias:   (C_out,)      float32
    Returns:
      y:      (..., C_out)  float32
    """
    *lead, C_in = x.shape
    C_out, C_in_w = weight.shape
    assert C_in == C_in_w

    x2d = x.reshape(-1, C_in)
    B = x2d.shape[0]

    # Pad to tile multiples: tm mult-of-8 rows, tn/tk mult-of-128 lanes.
    Mp = _round_up(max(B, 1), tm)
    Np = _round_up(max(C_out, 1), tn)
    Kp = _round_up(max(C_in, 1), tk)

    x_p = jnp.pad(x2d, ((0, Mp - B), (0, Kp - C_in)))
    w_p = jnp.pad(weight, ((0, Np - C_out), (0, Kp - C_in)))
    b_p = jnp.pad(bias, (0, Np - C_out)).reshape(1, Np)

    grid = (Mp // tm, Np // tn, Kp // tk)

    out = pl.pallas_call(
        _fc_kernel,
        out_shape=jax.ShapeDtypeStruct((Mp, Np), x.dtype),
        grid_spec=pltpu.PrefetchScalarGridSpec(
            num_scalar_prefetch=0,
            grid=grid,
            in_specs=[
                pl.BlockSpec((tm, tk), lambda i, j, k: (i, k)),   # x tile
                pl.BlockSpec((tn, tk), lambda i, j, k: (j, k)),   # weight tile
                pl.BlockSpec((1, tn), lambda i, j, k: (0, j)),    # bias tile (N only)
            ],
            out_specs=pl.BlockSpec((tm, tn), lambda i, j, k: (i, j)),
            scratch_shapes=[pltpu.VMEM((tm, tn), jnp.float32)],
        ),
        compiler_params=pltpu.CompilerParams(
            # M/N independent (megacore-shardable), K is the reduction axis.
            dimension_semantics=("parallel", "parallel", "arbitrary"),
            # Safe across v5e/v6e/v7x; tiles here use ~1-2 MiB double-buffered.
            vmem_limit_bytes=32 * 1024 * 1024,
        ),
    )(x_p, w_p, b_p)

    y = out[:B, :C_out]
    return y.reshape(*lead, C_out)


if __name__ == "__main__":
    # Small shapes consistent with FC(in_channels, out_channels): a linear layer.
    B, C_in, C_out = 8, 32, 16

    key = jax.random.PRNGKey(0)
    kx, kw, kb = jax.random.split(key, 3)

    # Deterministic synthetic parameters (PyTorch-style uniform init bound).
    bound = 1.0 / (C_in ** 0.5)
    x = jax.random.normal(kx, (B, C_in), dtype=jnp.float32)
    weight = jax.random.uniform(kw, (C_out, C_in), minval=-bound, maxval=bound,
                                dtype=jnp.float32)
    bias = jax.random.uniform(kb, (C_out,), minval=-bound, maxval=bound,
                              dtype=jnp.float32)

    y = fc_forward(x, weight, bias)
    jax.block_until_ready(y)

    # Reference check against plain JAX (same math as torch nn.Linear).
    y_ref = x @ weight.T + bias
    assert y.shape == (B, C_out)
    assert jnp.allclose(y, y_ref, atol=1e-5, rtol=1e-5)

    print("KERNEL_OK")
</pallas_src>

<mosaic_0001>
module attributes {stable_mosaic.version = 11 : i64} {
  func.func @_fc_kernel(%arg0: i32, %arg1: i32, %arg2: i32, %arg3: memref<128x256xf32, #tpu.memory_space<vmem>>, %arg4: memref<256x256xf32, #tpu.memory_space<vmem>>, %arg5: memref<1x256xf32, #tpu.memory_space<vmem>>, %arg6: memref<128x256xf32, #tpu.memory_space<vmem>>, %arg7: memref<128x256xf32, #tpu.memory_space<vmem>>) attributes {dimension_semantics = [#tpu.dimension_semantics<parallel>, #tpu.dimension_semantics<parallel>, #tpu.dimension_semantics<arbitrary>], iteration_bounds = array<i64: 1, 1, 1>, scalar_prefetch = 0 : i64, scratch_operands = 1 : i64, tpu.core_type = #tpu.core_type<tc>, window_params = [{transform_indices = @transform_0, window_bounds = array<i64: 128, 256>}, {transform_indices = @transform_1, window_bounds = array<i64: 256, 256>}, {transform_indices = @transform_2, window_bounds = array<i64: 1, 256>}, {transform_indices = @transform_3, window_bounds = array<i64: 128, 256>}]} {
    %c0_i32 = arith.constant 0 : i32
    %0 = arith.cmpi eq, %arg2, %c0_i32 : i32
    %1 = arith.extui %0 : i1 to i32
    %c0_i32_0 = arith.constant 0 : i32
    %2 = arith.cmpi ne, %1, %c0_i32_0 : i32
    scf.if %2 {
      %cst_10 = arith.constant 0.000000e+00 : f32
      %12 = vector.broadcast %cst_10 : f32 to vector<128x256xf32>
      %c0_11 = arith.constant 0 : index
      %c0_12 = arith.constant 0 : index
      %13 = vector.load %arg7[%c0_11, %c0_12] : memref<128x256xf32, #tpu.memory_space<vmem>>, vector<128x256xf32>
      tpu.vector_store %arg7[%c0_11, %c0_12], %12 {strides = array<i32>} : memref<128x256xf32, #tpu.memory_space<vmem>>, vector<128x256xf32>,
    } else {
    }
    %c0 = arith.constant 0 : index
    %c0_1 = arith.constant 0 : index
    %3 = vector.load %arg7[%c0, %c0_1] : memref<128x256xf32, #tpu.memory_space<vmem>>, vector<128x256xf32>
    %c0_2 = arith.constant 0 : index
    %c0_3 = arith.constant 0 : index
    %4 = vector.load %arg3[%c0_2, %c0_3] : memref<128x256xf32, #tpu.memory_space<vmem>>, vector<128x256xf32>
    %c0_4 = arith.constant 0 : index
    %c0_5 = arith.constant 0 : index
    %5 = vector.load %arg4[%c0_4, %c0_5] : memref<256x256xf32, #tpu.memory_space<vmem>>, vector<256x256xf32>
    %cst = arith.constant dense<0.000000e+00> : vector<128x256xf32>
    %6 = tpu.matmul %4, %5, %cst {dimension_numbers = #tpu.dot_dimension_numbers<[1], [1], [0], [0], [0, 0, 1, 0], [], []>} : vector<128x256xf32>, vector<256x256xf32>, vector<128x256xf32> -> vector<128x256xf32>
    %7 = arith.addf %3, %6 : vector<128x256xf32>
    %c0_6 = arith.constant 0 : index
    %c0_7 = arith.constant 0 : index
    %8 = vector.load %arg7[%c0_6, %c0_7] : memref<128x256xf32, #tpu.memory_space<vmem>>, vector<128x256xf32>
    tpu.vector_store %arg7[%c0_6, %c0_7], %7 {strides = array<i32>} : memref<128x256xf32, #tpu.memory_space<vmem>>, vector<128x256xf32>,
    %c0_i32_8 = arith.constant 0 : i32
    %9 = arith.cmpi eq, %arg2, %c0_i32_8 : i32
    %10 = arith.extui %9 : i1 to i32
    %c0_i32_9 = arith.constant 0 : i32
    %11 = arith.cmpi ne, %10, %c0_i32_9 : i32
    scf.if %11 {
      %c0_10 = arith.constant 0 : index
      %c0_11 = arith.constant 0 : index
      %12 = vector.load %arg7[%c0_10, %c0_11] : memref<128x256xf32, #tpu.memory_space<vmem>>, vector<128x256xf32>
      %c0_12 = arith.constant 0 : index
      %c0_13 = arith.constant 0 : index
      %13 = vector.load %arg5[%c0_12, %c0_13] : memref<1x256xf32, #tpu.memory_space<vmem>>, vector<1x256xf32>
      %14 = vector.broadcast %13 : vector<1x256xf32> to vector<128x256xf32>
      %15 = arith.addf %12, %14 : vector<128x256xf32>
      %c0_14 = arith.constant 0 : index
      %c0_15 = arith.constant 0 : index
      %16 = vector.load %arg6[%c0_14, %c0_15] : memref<128x256xf32, #tpu.memory_space<vmem>>, vector<128x256xf32>
      tpu.vector_store %arg6[%c0_14, %c0_15], %15 {strides = array<i32>} : memref<128x256xf32, #tpu.memory_space<vmem>>, vector<128x256xf32>,
    } else {
    }
    return
  }
  func.func @transform_0(%arg0: i32, %arg1: i32, %arg2: i32) -> (i32, i32) {
    %c0_i32 = arith.constant 0 : i32
    return %arg0, %arg2 : i32, i32
  }
  func.func @transform_1(%arg0: i32, %arg1: i32, %arg2: i32) -> (i32, i32) {
    %c0_i32 = arith.constant 0 : i32
    return %arg1, %arg2 : i32, i32
  }
  func.func @transform_2(%arg0: i32, %arg1: i32, %arg2: i32) -> (i32, i32) {
    %c0_i32 = arith.constant 0 : i32
    %c0_i32_0 = arith.constant 0 : i32
    return %c0_i32, %arg1 : i32, i32
  }
  func.func @transform_3(%arg0: i32, %arg1: i32, %arg2: i32) -> (i32, i32) {
    %c0_i32 = arith.constant 0 : i32
    return %arg0, %arg1 : i32, i32
  }
}

</mosaic_0001>

<llo_original>
// kernel: fc_forward.1
$region0: #{fc_forward.1}
  #allocation0 [shape = 'u32[]', space=smem, size = 0x4, offset = 0x4, fixed_abs, tag = 'smem constant byte address 0x4 - core index']
  #allocation1 [shape = 'u32[144,128]{1,0:T(1,128)}', space=vmem, size = 0x12000, scoped, tag = 'internal scratch']
  #allocation2 [shape = 'f32[128,256]{1,0:T(8,128)}', space=vmem, size = 0x20000, scoped, tag = 'scratch operand']
  %s0 = inlined_call_operand.vmem [shape: f32[128,256], index: 0, kind: input, shape index: {}]
  %s1 = inlined_call_operand.vmem [shape: f32[256,256], index: 1, kind: input, shape index: {}]
  %s2 = inlined_call_operand.vmem [shape: f32[1,256], index: 2, kind: input, shape index: {}]
  %s3 = inlined_call_operand.vmem [shape: f32[128,256], index: 3, kind: output, shape index: {}]
  %s4 = sld [smem:[#allocation0]]
  $region30: #{fc_forward.1} parent=0
    _
  %s6 = ssub.s32 1, %s4
  %s7 = scalar_select 0, %s6, %s4
  // Predicated region
  $region2: #{fc_forward.1} parent=0 // pred_check
    _
  $region3: #{fc_forward.1} parent=0 // pred_check_branch
    %9 = sbr.rel (0) target = $region5
  $region4: #{fc_forward.1} parent=0 // pred_region
    _
  $region5: #{fc_forward.1} parent=0 // pred_fallthru
    _
  // Predicated region
  $region6: #{fc_forward.1} parent=0 // pred_check
    _
  $region7: #{fc_forward.1} parent=0 // pred_check_branch
    %11 = sbr.rel (0) target = $region9
  $region8: #{fc_forward.1} parent=0 // pred_region
    _
  $region9: #{fc_forward.1} parent=0 // pred_fallthru
    _
  // Predicated region
  $region10: #{fc_forward.1} parent=0 // pred_check
    _
  $region11: #{fc_forward.1} parent=0 // pred_check_branch
    %13 = sbr.rel (0) target = $region13
  $region12: #{fc_forward.1} parent=0 // pred_region
    _
  $region13: #{fc_forward.1} parent=0 // pred_fallthru
    _
  %p14 = scmp.eq.s32.totalorder 0, 0
  // Predicated region
  $region14: #{fc_forward.1} parent=0 // pred_check
    %p15 = pneg %p14
  $region15: #{fc_forward.1} parent=0 // pred_check_branch
    %17 = sbr.rel (%p15) target = $region17
  $region16: #{fc_forward.1} parent=0 // pred_region
    %18 = vst [vmem:[#allocation2] sm:$0xff] 0.0
    %19 = vst [vmem:[#allocation2 + $0x8] sm:$0xff] 0.0
    %20 = vst [vmem:[#allocation2 + $0x10] sm:$0xff] 0.0
    %21 = vst [vmem:[#allocation2 + $0x18] sm:$0xff] 0.0
    %22 = vst [vmem:[#allocation2 + $0x20] sm:$0xff] 0.0
    %23 = vst [vmem:[#allocation2 + $0x28] sm:$0xff] 0.0
    %24 = vst [vmem:[#allocation2 + $0x30] sm:$0xff] 0.0
    %25 = vst [vmem:[#allocation2 + $0x38] sm:$0xff] 0.0
    %26 = vst [vmem:[#allocation2 + $0x40] sm:$0xff] 0.0
    %27 = vst [vmem:[#allocation2 + $0x48] sm:$0xff] 0.0
    %28 = vst [vmem:[#allocation2 + $0x50] sm:$0xff] 0.0
    %29 = vst [vmem:[#allocation2 + $0x58] sm:$0xff] 0.0
    %30 = vst [vmem:[#allocation2 + $0x60] sm:$0xff] 0.0
    %31 = vst [vmem:[#allocation2 + $0x68] sm:$0xff] 0.0
    %32 = vst [vmem:[#allocation2 + $0x70] sm:$0xff] 0.0
    %33 = vst [vmem:[#allocation2 + $0x78] sm:$0xff] 0.0
    %34 = vst [vmem:[#allocation2 + $0x80] sm:$0xff] 0.0
    %35 = vst [vmem:[#allocation2 + $0x88] sm:$0xff] 0.0
    %36 = vst [vmem:[#allocation2 + $0x90] sm:$0xff] 0.0
    %37 = vst [vmem:[#allocation2 + $0x98] sm:$0xff] 0.0
    %38 = vst [vmem:[#allocation2 + $0xa0] sm:$0xff] 0.0
    %39 = vst [vmem:[#allocation2 + $0xa8] sm:$0xff] 0.0
    %40 = vst [vmem:[#allocation2 + $0xb0] sm:$0xff] 0.0
    %41 = vst [vmem:[#allocation2 + $0xb8] sm:$0xff] 0.0
    %42 = vst [vmem:[#allocation2 + $0xc0] sm:$0xff] 0.0
    %43 = vst [vmem:[#allocation2 + $0xc8] sm:$0xff] 0.0
    %44 = vst [vmem:[#allocation2 + $0xd0] sm:$0xff] 0.0
    %45 = vst [vmem:[#allocation2 + $0xd8] sm:$0xff] 0.0
    %46 = vst [vmem:[#allocation2 + $0xe0] sm:$0xff] 0.0
    %47 = vst [vmem:[#allocation2 + $0xe8] sm:$0xff] 0.0
    %48 = vst [vmem:[#allocation2 + $0xf0] sm:$0xff] 0.0
    %49 = vst [vmem:[#allocation2 + $0xf8] sm:$0xff] 0.0
  $region17: #{fc_forward.1} parent=0 // pred_fallthru
    _
  %v50 = vld [vmem:[#allocation2] sm:$0xff]
  %v51 = vld [vmem:[#allocation2 + $0x8] sm:$0xff]
  %v52 = vld [vmem:[#allocation2 + $0x10] sm:$0xff]
  %v53 = vld [vmem:[#allocation2 + $0x18] sm:$0xff]
  %v54 = vld [vmem:[#allocation2 + $0x20] sm:$0xff]
  %v55 = vld [vmem:[#allocation2 + $0x28] sm:$0xff]
  %v56 = vld [vmem:[#allocation2 + $0x30] sm:$0xff]
  %v57 = vld [vmem:[#allocation2 + $0x38] sm:$0xff]
  %v58 = vld [vmem:[#allocation2 + $0x40] sm:$0xff]
  %v59 = vld [vmem:[#allocation2 + $0x48] sm:$0xff]
  %v60 = vld [vmem:[#allocation2 + $0x50] sm:$0xff]
  %v61 = vld [vmem:[#allocation2 + $0x58] sm:$0xff]
  %v62 = vld [vmem:[#allocation2 + $0x60] sm:$0xff]
  %v63 = vld [vmem:[#allocation2 + $0x68] sm:$0xff]
  %v64 = vld [vmem:[#allocation2 + $0x70] sm:$0xff]
  %v65 = vld [vmem:[#allocation2 + $0x78] sm:$0xff]
  %v66 = vld [vmem:[#allocation2 + $0x80] sm:$0xff]
  %v67 = vld [vmem:[#allocation2 + $0x88] sm:$0xff]
  %v68 = vld [vmem:[#allocation2 + $0x90] sm:$0xff]
  %v69 = vld [vmem:[#allocation2 + $0x98] sm:$0xff]
  %v70 = vld [vmem:[#allocation2 + $0xa0] sm:$0xff]
  %v71 = vld [vmem:[#allocation2 + $0xa8] sm:$0xff]
  %v72 = vld [vmem:[#allocation2 + $0xb0] sm:$0xff]
  %v73 = vld [vmem:[#allocation2 + $0xb8] sm:$0xff]
  %v74 = vld [vmem:[#allocation2 + $0xc0] sm:$0xff]
  %v75 = vld [vmem:[#allocation2 + $0xc8] sm:$0xff]
  %v76 = vld [vmem:[#allocation2 + $0xd0] sm:$0xff]
  %v77 = vld [vmem:[#allocation2 + $0xd8] sm:$0xff]
  %v78 = vld [vmem:[#allocation2 + $0xe0] sm:$0xff]
  %v79 = vld [vmem:[#allocation2 + $0xe8] sm:$0xff]
  %v80 = vld [vmem:[#allocation2 + $0xf0] sm:$0xff]
  %v81 = vld [vmem:[#allocation2 + $0xf8] sm:$0xff]
  %v82 = vld [vmem:[%s0] sm:$0xff]
  %v83 = vld [vmem:[%s0 + $0x8] sm:$0xff]
  %v84 = vld [vmem:[%s0 + $0x10] sm:$0xff]
  %v85 = vld [vmem:[%s0 + $0x18] sm:$0xff]
  %v86 = vld [vmem:[%s0 + $0x20] sm:$0xff]
  %v87 = vld [vmem:[%s0 + $0x28] sm:$0xff]
  %v88 = vld [vmem:[%s0 + $0x30] sm:$0xff]
  %v89 = vld [vmem:[%s0 + $0x38] sm:$0xff]
  %v90 = vld [vmem:[%s0 + $0x40] sm:$0xff]
  %v91 = vld [vmem:[%s0 + $0x48] sm:$0xff]
  %v92 = vld [vmem:[%s0 + $0x50] sm:$0xff]
  %v93 = vld [vmem:[%s0 + $0x58] sm:$0xff]
  %v94 = vld [vmem:[%s0 + $0x60] sm:$0xff]
  %v95 = vld [vmem:[%s0 + $0x68] sm:$0xff]
  %v96 = vld [vmem:[%s0 + $0x70] sm:$0xff]
  %v97 = vld [vmem:[%s0 + $0x78] sm:$0xff]
  %v98 = vld [vmem:[%s0 + $0x80] sm:$0xff]
  %v99 = vld [vmem:[%s0 + $0x88] sm:$0xff]
  %v100 = vld [vmem:[%s0 + $0x90] sm:$0xff]
  %v101 = vld [vmem:[%s0 + $0x98] sm:$0xff]
  %v102 = vld [vmem:[%s0 + $0xa0] sm:$0xff]
  %v103 = vld [vmem:[%s0 + $0xa8] sm:$0xff]
  %v104 = vld [vmem:[%s0 + $0xb0] sm:$0xff]
  %v105 = vld [vmem:[%s0 + $0xb8] sm:$0xff]
  %v106 = vld [vmem:[%s0 + $0xc0] sm:$0xff]
  %v107 = vld [vmem:[%s0 + $0xc8] sm:$0xff]
  %v108 = vld [vmem:[%s0 + $0xd0] sm:$0xff]
  %v109 = vld [vmem:[%s0 + $0xd8] sm:$0xff]
  %v110 = vld [vmem:[%s0 + $0xe0] sm:$0xff]
  %v111 = vld [vmem:[%s0 + $0xe8] sm:$0xff]
  %v112 = vld [vmem:[%s0 + $0xf0] sm:$0xff]
  %v113 = vld [vmem:[%s0 + $0xf8] sm:$0xff]
  %v114 = vld [vmem:[%s1] sm:$0xff]
  %v115 = vld [vmem:[%s1 + $0x8] sm:$0xff]
  %v116 = vld [vmem:[%s1 + $0x10] sm:$0xff]
  %v117 = vld [vmem:[%s1 + $0x18] sm:$0xff]
  %v118 = vld [vmem:[%s1 + $0x20] sm:$0xff]
  %v119 = vld [vmem:[%s1 + $0x28] sm:$0xff]
  %v120 = vld [vmem:[%s1 + $0x30] sm:$0xff]
  %v121 = vld [vmem:[%s1 + $0x38] sm:$0xff]
  %v122 = vld [vmem:[%s1 + $0x40] sm:$0xff]
  %v123 = vld [vmem:[%s1 + $0x48] sm:$0xff]
  %v124 = vld [vmem:[%s1 + $0x50] sm:$0xff]
  %v125 = vld [vmem:[%s1 + $0x58] sm:$0xff]
  %v126 = vld [vmem:[%s1 + $0x60] sm:$0xff]
  %v127 = vld [vmem:[%s1 + $0x68] sm:$0xff]
  %v128 = vld [vmem:[%s1 + $0x70] sm:$0xff]
  %v129 = vld [vmem:[%s1 + $0x78] sm:$0xff]
  %v130 = vld [vmem:[%s1 + $0x80] sm:$0xff]
  %v131 = vld [vmem:[%s1 + $0x88] sm:$0xff]
  %v132 = vld [vmem:[%s1 + $0x90] sm:$0xff]
  %v133 = vld [vmem:[%s1 + $0x98] sm:$0xff]
  %v134 = vld [vmem:[%s1 + $0xa0] sm:$0xff]
  %v135 = vld [vmem:[%s1 + $0xa8] sm:$0xff]
  %v136 = vld [vmem:[%s1 + $0xb0] sm:$0xff]
  %v137 = vld [vmem:[%s1 + $0xb8] sm:$0xff]
  %v138 = vld [vmem:[%s1 + $0xc0] sm:$0xff]
  %v139 = vld [vmem:[%s1 + $0xc8] sm:$0xff]
  %v140 = vld [vmem:[%s1 + $0xd0] sm:$0xff]
  %v141 = vld [vmem:[%s1 + $0xd8] sm:$0xff]
  %v142 = vld [vmem:[%s1 + $0xe0] sm:$0xff]
  %v143 = vld [vmem:[%s1 + $0xe8] sm:$0xff]
  %v144 = vld [vmem:[%s1 + $0xf0] sm:$0xff]
  %v145 = vld [vmem:[%s1 + $0xf8] sm:$0xff]
  %v146 = vld [vmem:[%s1 + $0x100] sm:$0xff]
  %v147 = vld [vmem:[%s1 + $0x108] sm:$0xff]
  %v148 = vld [vmem:[%s1 + $0x110] sm:$0xff]
  %v149 = vld [vmem:[%s1 + $0x118] sm:$0xff]
  %v150 = vld [vmem:[%s1 + $0x120] sm:$0xff]
  %v151 = vld [vmem:[%s1 + $0x128] sm:$0xff]
  %v152 = vld [vmem:[%s1 + $0x130] sm:$0xff]
  %v153 = vld [vmem:[%s1 + $0x138] sm:$0xff]
  %v154 = vld [vmem:[%s1 + $0x140] sm:$0xff]
  %v155 = vld [vmem:[%s1 + $0x148] sm:$0xff]
  %v156 = vld [vmem:[%s1 + $0x150] sm:$0xff]
  %v157 = vld [vmem:[%s1 + $0x158] sm:$0xff]
  %v158 = vld [vmem:[%s1 + $0x160] sm:$0xff]
  %v159 = vld [vmem:[%s1 + $0x168] sm:$0xff]
  %v160 = vld [vmem:[%s1 + $0x170] sm:$0xff]
  %v161 = vld [vmem:[%s1 + $0x178] sm:$0xff]
  %v162 = vld [vmem:[%s1 + $0x180] sm:$0xff]
  %v163 = vld [vmem:[%s1 + $0x188] sm:$0xff]
  %v164 = vld [vmem:[%s1 + $0x190] sm:$0xff]
  %v165 = vld [vmem:[%s1 + $0x198] sm:$0xff]
  %v166 = vld [vmem:[%s1 + $0x1a0] sm:$0xff]
  %v167 = vld [vmem:[%s1 + $0x1a8] sm:$0xff]
  %v168 = vld [vmem:[%s1 + $0x1b0] sm:$0xff]
  %v169 = vld [vmem:[%s1 + $0x1b8] sm:$0xff]
  %v170 = vld [vmem:[%s1 + $0x1c0] sm:$0xff]
  %v171 = vld [vmem:[%s1 + $0x1c8] sm:$0xff]
  %v172 = vld [vmem:[%s1 + $0x1d0] sm:$0xff]
  %v173 = vld [vmem:[%s1 + $0x1d8] sm:$0xff]
  %v174 = vld [vmem:[%s1 + $0x1e0] sm:$0xff]
  %v175 = vld [vmem:[%s1 + $0x1e8] sm:$0xff]
  %v176 = vld [vmem:[%s1 + $0x1f0] sm:$0xff]
  %v177 = vld [vmem:[%s1 + $0x1f8] sm:$0xff]
  %178 = vmatprep.subr.mxu0 %v145
  %179 = vmatpush1.xpose.msra.mxu0 %v144
  %180 = vmatprep.subr.mxu0 %v143
  %181 = vmatpush1.xpose.msra.mxu0 %v142
  %182 = vmatprep.subr.mxu0 %v141
  %183 = vmatpush1.xpose.msra.mxu0 %v140
  %184 = vmatprep.subr.mxu0 %v139
  %185 = vmatpush1.xpose.msra.mxu0 %v138
  %186 = vmatprep.subr.mxu0 %v137
  %187 = vmatpush1.xpose.msra.mxu0 %v136
  %188 = vmatprep.subr.mxu0 %v135
  %189 = vmatpush1.xpose.msra.mxu0 %v134
  %190 = vmatprep.subr.mxu0 %v133
  %191 = vmatpush1.xpose.msra.mxu0 %v132
  %192 = vmatprep.subr.mxu0 %v131
  %193 = vmatpush1.xpose.msra.mxu0 %v130
  %194 = vmatprep.subr.mxu0 %v129
  %195 = vmatpush1.xpose.msra.mxu0 %v128
  %196 = vmatprep.subr.mxu0 %v127
  %197 = vmatpush1.xpose.msra.mxu0 %v126
  %198 = vmatprep.subr.mxu0 %v125
  %199 = vmatpush1.xpose.msra.mxu0 %v124
  %200 = vmatprep.subr.mxu0 %v123
  %201 = vmatpush1.xpose.msra.mxu0 %v122
  %202 = vmatprep.subr.mxu0 %v121
  %203 = vmatpush1.xpose.msra.mxu0 %v120
  %204 = vmatprep.subr.mxu0 %v119
  %205 = vmatpush1.xpose.msra.mxu0 %v118
  %206 = vmatprep.subr.mxu0 %v117
  %207 = vmatpush1.xpose.msra.mxu0 %v116
  %208 = vmatprep.subr.mxu0 %v115
  %209 = vmatpush1.xpose.msra.mxu0 %v114
  %210 = vmatprep.subr.mxu0 %v177
  %211 = vmatpush2.xpose.msra.mxu0 %v176
  %212 = vmatprep.subr.mxu0 %v175
  %213 = vmatpush2.xpose.msra.mxu0 %v174
  %214 = vmatprep.subr.mxu0 %v173
  %215 = vmatpush2.xpose.msra.mxu0 %v172
  %216 = vmatprep.subr.mxu0 %v171
  %217 = vmatpush2.xpose.msra.mxu0 %v170
  %218 = vmatprep.subr.mxu0 %v169
  %219 = vmatpush2.xpose.msra.mxu0 %v168
  %220 = vmatprep.subr.mxu0 %v167
  %221 = vmatpush2.xpose.msra.mxu0 %v166
  %222 = vmatprep.subr.mxu0 %v165
  %223 = vmatpush2.xpose.msra.mxu0 %v164
  %224 = vmatprep.subr.mxu0 %v163
  %225 = vmatpush2.xpose.msra.mxu0 %v162
  %226 = vmatprep.subr.mxu0 %v161
  %227 = vmatpush2.xpose.msra.mxu0 %v160
  %228 = vmatprep.subr.mxu0 %v159
  %229 = vmatpush2.xpose.msra.mxu0 %v158
  %230 = vmatprep.subr.mxu0 %v157
  %231 = vmatpush2.xpose.msra.mxu0 %v156
  %232 = vmatprep.subr.mxu0 %v155
  %233 = vmatpush2.xpose.msra.mxu0 %v154
  %234 = vmatprep.subr.mxu0 %v153
  %235 = vmatpush2.xpose.msra.mxu0 %v152
  %236 = vmatprep.subr.mxu0 %v151
  %237 = vmatpush2.xpose.msra.mxu0 %v150
  %238 = vmatprep.subr.mxu0 %v149
  %239 = vmatpush2.xpose.msra.mxu0 %v148
  %240 = vmatprep.subr.mxu0 %v147
  %241 = vmatpush2.xpose.msra.mxu0 %v146
  %242 = vmatprep.mubr.f32.mxu0 %v83
  %243 = vmatmul.mubr.f32.gmra.mxu0 %v82
  %v244 = vpop.f32.mrf.mxu0
  %v245 = vadd.f32 0.0, %v244
  %v246 = vpop.f32.mrf.mxu0
  %v247 = vadd.f32 0.0, %v246
  %248 = vmatprep.mubr.f32.mxu0 %v85
  %249 = vmatmul.mubr.f32.gmra.mxu0 %v84
  %v250 = vpop.f32.mrf.mxu0
  %v251 = vadd.f32 0.0, %v250
  %v252 = vpop.f32.mrf.mxu0
  %v253 = vadd.f32 0.0, %v252
  %254 = vmatprep.mubr.f32.mxu0 %v87
  %255 = vmatmul.mubr.f32.gmra.mxu0 %v86
  %v256 = vpop.f32.mrf.mxu0
  %v257 = vadd.f32 0.0, %v256
  %v258 = vpop.f32.mrf.mxu0
  %v259 = vadd.f32 0.0, %v258
  %260 = vmatprep.mubr.f32.mxu0 %v89
  %261 = vmatmul.mubr.f32.gmra.mxu0 %v88
  %v262 = vpop.f32.mrf.mxu0
  %v263 = vadd.f32 0.0, %v262
  %v264 = vpop.f32.mrf.mxu0
  %v265 = vadd.f32 0.0, %v264
  %266 = vmatprep.mubr.f32.mxu0 %v91
  %267 = vmatmul.mubr.f32.gmra.mxu0 %v90
  %v268 = vpop.f32.mrf.mxu0
  %v269 = vadd.f32 0.0, %v268
  %v270 = vpop.f32.mrf.mxu0
  %v271 = vadd.f32 0.0, %v270
  %272 = vmatprep.mubr.f32.mxu0 %v93
  %273 = vmatmul.mubr.f32.gmra.mxu0 %v92
  %v274 = vpop.f32.mrf.mxu0
  %v275 = vadd.f32 0.0, %v274
  %v276 = vpop.f32.mrf.mxu0
  %v277 = vadd.f32 0.0, %v276
  %278 = vmatprep.mubr.f32.mxu0 %v95
  %279 = vmatmul.mubr.f32.gmra.mxu0 %v94
  %v280 = vpop.f32.mrf.mxu0
  %v281 = vadd.f32 0.0, %v280
  %v282 = vpop.f32.mrf.mxu0
  %v283 = vadd.f32 0.0, %v282
  %284 = vmatprep.mubr.f32.mxu0 %v97
  %285 = vmatmul.mubr.f32.gmra.mxu0 %v96
  %v286 = vpop.f32.mrf.mxu0
  %v287 = vadd.f32 0.0, %v286
  %v288 = vpop.f32.mrf.mxu0
  %v289 = vadd.f32 0.0, %v288
  %290 = vmatprep.mubr.f32.mxu0 %v99
  %291 = vmatmul.mubr.f32.gmra.mxu0 %v98
  %v292 = vpop.f32.mrf.mxu0
  %v293 = vadd.f32 0.0, %v292
  %v294 = vpop.f32.mrf.mxu0
  %v295 = vadd.f32 0.0, %v294
  %296 = vmatprep.mubr.f32.mxu0 %v101
  %297 = vmatmul.mubr.f32.gmra.mxu0 %v100
  %v298 = vpop.f32.mrf.mxu0
  %v299 = vadd.f32 0.0, %v298
  %v300 = vpop.f32.mrf.mxu0
  %v301 = vadd.f32 0.0, %v300
  %302 = vmatprep.mubr.f32.mxu0 %v103
  %303 = vmatmul.mubr.f32.gmra.mxu0 %v102
  %v304 = vpop.f32.mrf.mxu0
  %v305 = vadd.f32 0.0, %v304
  %v306 = vpop.f32.mrf.mxu0
  %v307 = vadd.f32 0.0, %v306
  %308 = vmatprep.mubr.f32.mxu0 %v105
  %309 = vmatmul.mubr.f32.gmra.mxu0 %v104
  %v310 = vpop.f32.mrf.mxu0
  %v311 = vadd.f32 0.0, %v310
  %v312 = vpop.f32.mrf.mxu0
  %v313 = vadd.f32 0.0, %v312
  %314 = vmatprep.mubr.f32.mxu0 %v107
  %315 = vmatmul.mubr.f32.gmra.mxu0 %v106
  %v316 = vpop.f32.mrf.mxu0
  %v317 = vadd.f32 0.0, %v316
  %v318 = vpop.f32.mrf.mxu0
  %v319 = vadd.f32 0.0, %v318
  %320 = vmatprep.mubr.f32.mxu0 %v109
  %321 = vmatmul.mubr.f32.gmra.mxu0 %v108
  %v322 = vpop.f32.mrf.mxu0
  %v323 = vadd.f32 0.0, %v322
  %v324 = vpop.f32.mrf.mxu0
  %v325 = vadd.f32 0.0, %v324
  %326 = vmatprep.mubr.f32.mxu0 %v111
  %327 = vmatmul.mubr.f32.gmra.mxu0 %v110
  %v328 = vpop.f32.mrf.mxu0
  %v329 = vadd.f32 0.0, %v328
  %v330 = vpop.f32.mrf.mxu0
  %v331 = vadd.f32 0.0, %v330
  %332 = vmatprep.mubr.f32.mxu0 %v113
  %333 = vmatmul.mubr.f32.gmra.mxu0 %v112
  %v334 = vpop.f32.mrf.mxu0
  %v335 = vadd.f32 0.0, %v334
  %v336 = vpop.f32.mrf.mxu0
  %v337 = vadd.f32 0.0, %v336
  %338 = vdwg.mxu0
  %v339 = vadd.f32 %v50, %v245
  %v340 = vadd.f32 %v51, %v247
  %v341 = vadd.f32 %v52, %v251
  %v342 = vadd.f32 %v53, %v253
  %v343 = vadd.f32 %v54, %v257
  %v344 = vadd.f32 %v55, %v259
  %v345 = vadd.f32 %v56, %v263
  %v346 = vadd.f32 %v57, %v265
  %v347 = vadd.f32 %v58, %v269
  %v348 = vadd.f32 %v59, %v271
  %v349 = vadd.f32 %v60, %v275
  %v350 = vadd.f32 %v61, %v277
  %v351 = vadd.f32 %v62, %v281
  %v352 = vadd.f32 %v63, %v283
  %v353 = vadd.f32 %v64, %v287
  %v354 = vadd.f32 %v65, %v289
  %v355 = vadd.f32 %v66, %v293
  %v356 = vadd.f32 %v67, %v295
  %v357 = vadd.f32 %v68, %v299
  %v358 = vadd.f32 %v69, %v301
  %v359 = vadd.f32 %v70, %v305
  %v360 = vadd.f32 %v71, %v307
  %v361 = vadd.f32 %v72, %v311
  %v362 = vadd.f32 %v73, %v313
  %v363 = vadd.f32 %v74, %v317
  %v364 = vadd.f32 %v75, %v319
  %v365 = vadd.f32 %v76, %v323
  %v366 = vadd.f32 %v77, %v325
  %v367 = vadd.f32 %v78, %v329
  %v368 = vadd.f32 %v79, %v331
  %v369 = vadd.f32 %v80, %v335
  %v370 = vadd.f32 %v81, %v337
  %371 = vst [vmem:[#allocation2] sm:$0xff] %v339
  %372 = vst [vmem:[#allocation2 + $0x8] sm:$0xff] %v340
  %373 = vst [vmem:[#allocation2 + $0x10] sm:$0xff] %v341
  %374 = vst [vmem:[#allocation2 + $0x18] sm:$0xff] %v342
  %375 = vst [vmem:[#allocation2 + $0x20] sm:$0xff] %v343
  %376 = vst [vmem:[#allocation2 + $0x28] sm:$0xff] %v344
  %377 = vst [vmem:[#allocation2 + $0x30] sm:$0xff] %v345
  %378 = vst [vmem:[#allocation2 + $0x38] sm:$0xff] %v346
  %379 = vst [vmem:[#allocation2 + $0x40] sm:$0xff] %v347
  %380 = vst [vmem:[#allocation2 + $0x48] sm:$0xff] %v348
  %381 = vst [vmem:[#allocation2 + $0x50] sm:$0xff] %v349
  %382 = vst [vmem:[#allocation2 + $0x58] sm:$0xff] %v350
  %383 = vst [vmem:[#allocation2 + $0x60] sm:$0xff] %v351
  %384 = vst [vmem:[#allocation2 + $0x68] sm:$0xff] %v352
  %385 = vst [vmem:[#allocation2 + $0x70] sm:$0xff] %v353
  %386 = vst [vmem:[#allocation2 + $0x78] sm:$0xff] %v354
  %387 = vst [vmem:[#allocation2 + $0x80] sm:$0xff] %v355
  %388 = vst [vmem:[#allocation2 + $0x88] sm:$0xff] %v356
  %389 = vst [vmem:[#allocation2 + $0x90] sm:$0xff] %v357
  %390 = vst [vmem:[#allocation2 + $0x98] sm:$0xff] %v358
  %391 = vst [vmem:[#allocation2 + $0xa0] sm:$0xff] %v359
  %392 = vst [vmem:[#allocation2 + $0xa8] sm:$0xff] %v360
  %393 = vst [vmem:[#allocation2 + $0xb0] sm:$0xff] %v361
  %394 = vst [vmem:[#allocation2 + $0xb8] sm:$0xff] %v362
  %395 = vst [vmem:[#allocation2 + $0xc0] sm:$0xff] %v363
  %396 = vst [vmem:[#allocation2 + $0xc8] sm:$0xff] %v364
  %397 = vst [vmem:[#allocation2 + $0xd0] sm:$0xff] %v365
  %398 = vst [vmem:[#allocation2 + $0xd8] sm:$0xff] %v366
  %399 = vst [vmem:[#allocation2 + $0xe0] sm:$0xff] %v367
  %400 = vst [vmem:[#allocation2 + $0xe8] sm:$0xff] %v368
  %401 = vst [vmem:[#allocation2 + $0xf0] sm:$0xff] %v369
  %402 = vst [vmem:[#allocation2 + $0xf8] sm:$0xff] %v370
  // Predicated region
  $region18: #{fc_forward.1} parent=0 // pred_check
    %p403 = pneg %p14
  $region19: #{fc_forward.1} parent=0 // pred_check_branch
    %405 = sbr.rel (%p403) target = $region21
  $region20: #{fc_forward.1} parent=0 // pred_region
    %v406 = vld [vmem:[#allocation2] sm:$0xff]
    %v407 = vld [vmem:[#allocation2 + $0x8] sm:$0xff]
    %v408 = vld [vmem:[#allocation2 + $0x10] sm:$0xff]
    %v409 = vld [vmem:[#allocation2 + $0x18] sm:$0xff]
    %v410 = vld [vmem:[#allocation2 + $0x20] sm:$0xff]
    %v411 = vld [vmem:[#allocation2 + $0x28] sm:$0xff]
    %v412 = vld [vmem:[#allocation2 + $0x30] sm:$0xff]
    %v413 = vld [vmem:[#allocation2 + $0x38] sm:$0xff]
    %v414 = vld [vmem:[#allocation2 + $0x40] sm:$0xff]
    %v415 = vld [vmem:[#allocation2 + $0x48] sm:$0xff]
    %v416 = vld [vmem:[#allocation2 + $0x50] sm:$0xff]
    %v417 = vld [vmem:[#allocation2 + $0x58] sm:$0xff]
    %v418 = vld [vmem:[#allocation2 + $0x60] sm:$0xff]
    %v419 = vld [vmem:[#allocation2 + $0x68] sm:$0xff]
    %v420 = vld [vmem:[#allocation2 + $0x70] sm:$0xff]
    %v421 = vld [vmem:[#allocation2 + $0x78] sm:$0xff]
    %v422 = vld [vmem:[#allocation2 + $0x80] sm:$0xff]
    %v423 = vld [vmem:[#allocation2 + $0x88] sm:$0xff]
    %v424 = vld [vmem:[#allocation2 + $0x90] sm:$0xff]
    %v425 = vld [vmem:[#allocation2 + $0x98] sm:$0xff]
    %v426 = vld [vmem:[#allocation2 + $0xa0] sm:$0xff]
    %v427 = vld [vmem:[#allocation2 + $0xa8] sm:$0xff]
    %v428 = vld [vmem:[#allocation2 + $0xb0] sm:$0xff]
    %v429 = vld [vmem:[#allocation2 + $0xb8] sm:$0xff]
    %v430 = vld [vmem:[#allocation2 + $0xc0] sm:$0xff]
    %v431 = vld [vmem:[#allocation2 + $0xc8] sm:$0xff]
    %v432 = vld [vmem:[#allocation2 + $0xd0] sm:$0xff]
    %v433 = vld [vmem:[#allocation2 + $0xd8] sm:$0xff]
    %v434 = vld [vmem:[#allocation2 + $0xe0] sm:$0xff]
    %v435 = vld [vmem:[#allocation2 + $0xe8] sm:$0xff]
    %v436 = vld [vmem:[#allocation2 + $0xf0] sm:$0xff]
    %v437 = vld [vmem:[#allocation2 + $0xf8] sm:$0xff]
    %v438 = vld [vmem:[%s2] sm:$0x3]
    %v440 = vlaneseq
    %v441 = vshrl.u32 %v440, 7
    %v442 = vsub.s32 0, %v441
    %v443 = vrot.slane %v438, %v442
    %v444 = vlaneseq
    %v445 = vshrl.u32 %v444, 7
    %v446 = vsub.s32 1, %v445
    %v447 = vrot.slane %v438, %v446
    %v450 = vadd.f32 %v406, %v443
    %v451 = vadd.f32 %v407, %v447
    %v452 = vadd.f32 %v408, %v443
    %v453 = vadd.f32 %v409, %v447
    %v454 = vadd.f32 %v410, %v443
    %v455 = vadd.f32 %v411, %v447
    %v456 = vadd.f32 %v412, %v443
    %v457 = vadd.f32 %v413, %v447
    %v458 = vadd.f32 %v414, %v443
    %v459 = vadd.f32 %v415, %v447
    %v460 = vadd.f32 %v416, %v443
    %v461 = vadd.f32 %v417, %v447
    %v462 = vadd.f32 %v418, %v443
    %v463 = vadd.f32 %v419, %v447
    %v464 = vadd.f32 %v420, %v443
    %v465 = vadd.f32 %v421, %v447
    %v466 = vadd.f32 %v422, %v443
    %v467 = vadd.f32 %v423, %v447
    %v468 = vadd.f32 %v424, %v443
    %v469 = vadd.f32 %v425, %v447
    %v470 = vadd.f32 %v426, %v443
    %v471 = vadd.f32 %v427, %v447
    %v472 = vadd.f32 %v428, %v443
    %v473 = vadd.f32 %v429, %v447
    %v474 = vadd.f32 %v430, %v443
    %v475 = vadd.f32 %v431, %v447
    %v476 = vadd.f32 %v432, %v443
    %v477 = vadd.f32 %v433, %v447
    %v478 = vadd.f32 %v434, %v443
    %v479 = vadd.f32 %v435, %v447
    %v480 = vadd.f32 %v436, %v443
    %v481 = vadd.f32 %v437, %v447
    %482 = vst [vmem:[%s3] sm:$0xff] %v450
    %483 = vst [vmem:[%s3 + $0x8] sm:$0xff] %v451
    %484 = vst [vmem:[%s3 + $0x10] sm:$0xff] %v452
    %485 = vst [vmem:[%s3 + $0x18] sm:$0xff] %v453
    %486 = vst [vmem:[%s3 + $0x20] sm:$0xff] %v454
    %487 = vst [vmem:[%s3 + $0x28] sm:$0xff] %v455
    %488 = vst [vmem:[%s3 + $0x30] sm:$0xff] %v456
    %489 = vst [vmem:[%s3 + $0x38] sm:$0xff] %v457
    %490 = vst [vmem:[%s3 + $0x40] sm:$0xff] %v458
    %491 = vst [vmem:[%s3 + $0x48] sm:$0xff] %v459
    %492 = vst [vmem:[%s3 + $0x50] sm:$0xff] %v460
    %493 = vst [vmem:[%s3 + $0x58] sm:$0xff] %v461
    %494 = vst [vmem:[%s3 + $0x60] sm:$0xff] %v462
    %495 = vst [vmem:[%s3 + $0x68] sm:$0xff] %v463
    %496 = vst [vmem:[%s3 + $0x70] sm:$0xff] %v464
    %497 = vst [vmem:[%s3 + $0x78] sm:$0xff] %v465
    %498 = vst [vmem:[%s3 + $0x80] sm:$0xff] %v466
    %499 = vst [vmem:[%s3 + $0x88] sm:$0xff] %v467
    %500 = vst [vmem:[%s3 + $0x90] sm:$0xff] %v468
    %501 = vst [vmem:[%s3 + $0x98] sm:$0xff] %v469
    %502 = vst [vmem:[%s3 + $0xa0] sm:$0xff] %v470
    %503 = vst [vmem:[%s3 + $0xa8] sm:$0xff] %v471
    %504 = vst [vmem:[%s3 + $0xb0] sm:$0xff] %v472
    %505 = vst [vmem:[%s3 + $0xb8] sm:$0xff] %v473
    %506 = vst [vmem:[%s3 + $0xc0] sm:$0xff] %v474
    %507 = vst [vmem:[%s3 + $0xc8] sm:$0xff] %v475
    %508 = vst [vmem:[%s3 + $0xd0] sm:$0xff] %v476
    %509 = vst [vmem:[%s3 + $0xd8] sm:$0xff] %v477
    %510 = vst [vmem:[%s3 + $0xe0] sm:$0xff] %v478
    %511 = vst [vmem:[%s3 + $0xe8] sm:$0xff] %v479
    %512 = vst [vmem:[%s3 + $0xf0] sm:$0xff] %v480
    %513 = vst [vmem:[%s3 + $0xf8] sm:$0xff] %v481
  $region21: #{fc_forward.1} parent=0 // pred_fallthru
    _
  // Predicated region
  $region22: #{fc_forward.1} parent=0 // pred_check
    _
  $region23: #{fc_forward.1} parent=0 // pred_check_branch
    %515 = sbr.rel (0) target = $region25
  $region24: #{fc_forward.1} parent=0 // pred_region
    _
  $region25: #{fc_forward.1} parent=0 // pred_fallthru
    _
  // Predicated region
  $region26: #{fc_forward.1} parent=0 // pred_check
    _
  $region27: #{fc_forward.1} parent=0 // pred_check_branch
    %517 = sbr.rel (0) target = $region29
  $region28: #{fc_forward.1} parent=0 // pred_region
    _
  $region29: #{fc_forward.1} parent=0 // pred_fallthru
    _

</llo_original>
